<compile_context>
chip_gen: v7x
topology: tpu7x:2x2x1
jax: 0.10.0
libtpu: 0.0.40
codegen_flags: <defaults>
</compile_context>

<pallas_src>
import functools

import jax
import jax.numpy as jnp
from jax.experimental import pallas as pl
from jax.experimental.pallas import tpu as pltpu


def _rmsnorm_kernel(x_ref, w_ref, b_ref, o_ref, *, eps, inv_h):
    # x_ref: (TR, H) tile of rows; w_ref / b_ref: (1, H) broadcast params.
    x = x_ref[...].astype(jnp.float32)
    w = w_ref[...].astype(jnp.float32)
    b = b_ref[...].astype(jnp.float32)
    # sum * (1/H) instead of mean: cross-lane reduce on the XLU, scale folded
    # into a VPU multiply; rsqrt dispatches to the EUP (separate bundle slot).
    ms = jnp.sum(x * x, axis=-1, keepdims=True) * inv_h
    inv_rms = jax.lax.rsqrt(ms + eps)
    y = x * inv_rms * w + b
    o_ref[...] = y.astype(o_ref.dtype)


def _round_up(n, m):
    return ((n + m - 1) // m) * m


def _vmem_budget_bytes():
    """Usable per-step VMEM budget, with headroom under physical capacity."""
    cap = 64 << 20  # conservative fallback = v7x physical VMEM
    try:
        info = pltpu.get_tpu_info()
        cap_attr = getattr(info, "vmem_capacity_bytes", None)
        if cap_attr:
            cap = int(cap_attr)
    except Exception:
        pass
    return int(cap * 0.75)  # headroom for compiler scratch / intermediates


def _pick_row_tile(R, H, in_bytes, out_bytes, vmem_budget):
    """Largest row tile whose pipelined footprint fits the VMEM budget."""
    # Double-buffered input + output tiles, plus ~2 f32 intermediates the
    # compiler materializes for the upcast x and the scaled result.
    per_row = H * (2 * in_bytes + 2 * out_bytes + 2 * 4)
    tr = max(8, vmem_budget // max(per_row, 1))
    tr = min(tr, 1024)  # diminishing returns past ~512-1024 rows
    # Keep >=2 grid steps when possible so v7x can split rows across 2 TCs.
    if R > 8:
        tr = min(tr, _round_up(pl.cdiv(R, 2), 8))
    tr = min(tr, _round_up(max(R, 1), 8))
    return _round_up(tr, 8)


def rmsnorm(x, weight, bias, *, eps=1e-12, row_tile=None):
    """Apply RMSNorm over the last axis of x with per-feature weight/bias."""
    orig_shape = x.shape
    H = orig_shape[-1]
    x2d = x.reshape(-1, H)
    R = x2d.shape[0]

    if R == 0:
        # Empty input: nothing to normalize; avoid a zero-sized grid.
        return jnp.zeros(orig_shape, x.dtype)

    vmem_budget = _vmem_budget_bytes()
    if row_tile is None:
        tr = _pick_row_tile(R, H, jnp.dtype(x.dtype).itemsize,
                            jnp.dtype(x.dtype).itemsize, vmem_budget)
    else:
        tr = _round_up(max(8, min(row_tile, _round_up(R, 8))), 8)

    # TODO(synk): for H < 128 (e.g. the H=32 smoke test) output stores are
    # lane-masked (vst.msk); packing several rows per 128-lane group would
    # need a segmented reduction and is not worth it for the common LLM case
    # where H is a multiple of 128 (fully lane-dense).

    w2d = weight.reshape(1, H)
    b2d = bias.reshape(1, H)

    grid = (pl.cdiv(R, tr),)  # ragged last block handled by Pallas masking
    out = pl.pallas_call(
        functools.partial(_rmsnorm_kernel, eps=float(eps), inv_h=1.0 / H),
        out_shape=jax.ShapeDtypeStruct((R, H), x.dtype),
        grid_spec=pltpu.PrefetchScalarGridSpec(
            num_scalar_prefetch=0,
            grid=grid,
            in_specs=[
                pl.BlockSpec((tr, H), lambda i: (i, 0)),   # x row tile
                pl.BlockSpec((1, H), lambda i: (0, 0)),    # weight (broadcast)
                pl.BlockSpec((1, H), lambda i: (0, 0)),    # bias   (broadcast)
            ],
            out_specs=pl.BlockSpec((tr, H), lambda i: (i, 0)),
        ),
        compiler_params=pltpu.CompilerParams(
            dimension_semantics=("parallel",),
            vmem_limit_bytes=vmem_budget,
        ),
    )(x2d, w2d, b2d)

    return out.reshape(orig_shape)


def rmsnorm_ref(x, weight, bias, eps=1e-12):
    xf = x.astype(jnp.float32)
    rms = jnp.sqrt(jnp.mean(xf * xf, axis=-1, keepdims=True) + eps)
    return (xf / rms * weight.astype(jnp.float32)
            + bias.astype(jnp.float32)).astype(x.dtype)


if __name__ == "__main__":
    key = jax.random.PRNGKey(0)
    B, S, H = 2, 8, 32          # batch=2, seq=8, hidden=32
    kx, ky = jax.random.split(key, 2)
    x = jax.random.normal(kx, (B, S, H), dtype=jnp.float32)

    # Deterministic parameter init matching BaseRMSNorm.__init__:
    weight = jnp.ones((H,), dtype=jnp.float32)
    bias = jnp.zeros((H,), dtype=jnp.float32)

    y = rmsnorm(x, weight, bias, eps=1e-12)
    y = jax.block_until_ready(y)
    y_ref = rmsnorm_ref(x, weight, bias, eps=1e-12)
    assert y.shape == x.shape and y.dtype == x.dtype
    assert jnp.allclose(y, y_ref, atol=1e-5, rtol=1e-5)

    # Second check: row count not a multiple of the tile (ragged last block).
    x2 = jax.random.normal(ky, (3, 5, H), dtype=jnp.float32)
    y2 = jax.block_until_ready(rmsnorm(x2, weight, bias, eps=1e-12))
    y2_ref = rmsnorm_ref(x2, weight, bias, eps=1e-12)
    assert jnp.allclose(y2, y2_ref, atol=1e-5, rtol=1e-5)

    # Third check: non-trivial (non-constant) parameters + bf16 activations.
    kw, kb, kx3 = jax.random.split(key, 3)
    H2 = 256
    w3 = jax.random.normal(kw, (H2,), dtype=jnp.float32)
    b3 = jax.random.normal(kb, (H2,), dtype=jnp.float32)
    x3 = jax.random.normal(kx3, (4, 17, H2), dtype=jnp.bfloat16)
    y3 = jax.block_until_ready(rmsnorm(x3, w3, b3, eps=1e-12))
    y3_ref = rmsnorm_ref(x3, w3, b3, eps=1e-12)
    assert y3.dtype == x3.dtype
    assert jnp.allclose(y3.astype(jnp.float32), y3_ref.astype(jnp.float32),
                        atol=2e-2, rtol=2e-2)

    print("KERNEL_OK")
</pallas_src>

<mosaic_0001>
module attributes {stable_mosaic.version = 11 : i64} {
  func.func @_rmsnorm_kernel(%arg0: i32, %arg1: memref<8x32xf32, #tpu.memory_space<vmem>>, %arg2: memref<1x32xf32, #tpu.memory_space<vmem>>, %arg3: memref<1x32xf32, #tpu.memory_space<vmem>>, %arg4: memref<8x32xf32, #tpu.memory_space<vmem>>) attributes {dimension_semantics = [#tpu.dimension_semantics<parallel>], iteration_bounds = array<i64: 2>, scalar_prefetch = 0 : i64, scratch_operands = 0 : i64, tpu.core_type = #tpu.core_type<tc>, window_params = [{transform_indices = @transform_0, window_bounds = array<i64: 8, 32>}, {pipeline_mode = #tpu.pipeline_mode<synchronous>, transform_indices = @transform_1, window_bounds = array<i64: 1, 32>}, {pipeline_mode = #tpu.pipeline_mode<synchronous>, transform_indices = @transform_2, window_bounds = array<i64: 1, 32>}, {transform_indices = @transform_3, window_bounds = array<i64: 8, 32>}]} {
    %c0 = arith.constant 0 : index
    %c0_0 = arith.constant 0 : index
    %0 = vector.load %arg1[%c0, %c0_0] : memref<8x32xf32, #tpu.memory_space<vmem>>, vector<8x32xf32>
    %c0_1 = arith.constant 0 : index
    %c0_2 = arith.constant 0 : index
    %1 = vector.load %arg2[%c0_1, %c0_2] : memref<1x32xf32, #tpu.memory_space<vmem>>, vector<1x32xf32>
    %c0_3 = arith.constant 0 : index
    %c0_4 = arith.constant 0 : index
    %2 = vector.load %arg3[%c0_3, %c0_4] : memref<1x32xf32, #tpu.memory_space<vmem>>, vector<1x32xf32>
    %3 = arith.mulf %0, %0 : vector<8x32xf32>
    %cst = arith.constant dense<0.000000e+00> : vector<8xf32>
    %4 = vector.multi_reduction <add>, %3, %cst [1] : vector<8x32xf32> to vector<8xf32>
    %5 = vector.shape_cast %4 : vector<8xf32> to vector<8x1xf32>
    %cst_5 = arith.constant 3.125000e-02 : f32
    %6 = vector.broadcast %cst_5 : f32 to vector<8x1xf32>
    %7 = arith.mulf %5, %6 : vector<8x1xf32>
    %cst_6 = arith.constant 9.99999996E-13 : f32
    %8 = vector.broadcast %cst_6 : f32 to vector<8x1xf32>
    %9 = arith.addf %7, %8 : vector<8x1xf32>
    %10 = math.rsqrt %9 : vector<8x1xf32>
    %11 = vector.broadcast %10 : vector<8x1xf32> to vector<8x32xf32>
    %12 = arith.mulf %0, %11 : vector<8x32xf32>
    %13 = vector.broadcast %1 : vector<1x32xf32> to vector<8x32xf32>
    %14 = arith.mulf %12, %13 : vector<8x32xf32>
    %15 = vector.broadcast %2 : vector<1x32xf32> to vector<8x32xf32>
    %16 = arith.addf %14, %15 : vector<8x32xf32>
    %c0_7 = arith.constant 0 : index
    %c0_8 = arith.constant 0 : index
    %17 = vector.load %arg4[%c0_7, %c0_8] : memref<8x32xf32, #tpu.memory_space<vmem>>, vector<8x32xf32>
    tpu.vector_store %arg4[%c0_7, %c0_8], %16 {strides = array<i32>} : memref<8x32xf32, #tpu.memory_space<vmem>>, vector<8x32xf32>,
    return
  }
  func.func @transform_0(%arg0: i32) -> (i32, i32) {
    %c0_i32 = arith.constant 0 : i32
    %c0_i32_0 = arith.constant 0 : i32
    return %arg0, %c0_i32 : i32, i32
  }
  func.func @transform_1(%arg0: i32) -> (i32, i32) {
    %c0_i32 = arith.constant 0 : i32
    %c0_i32_0 = arith.constant 0 : i32
    %c0_i32_1 = arith.constant 0 : i32
    return %c0_i32, %c0_i32_0 : i32, i32
  }
  func.func @transform_2(%arg0: i32) -> (i32, i32) {
    %c0_i32 = arith.constant 0 : i32
    %c0_i32_0 = arith.constant 0 : i32
    %c0_i32_1 = arith.constant 0 : i32
    return %c0_i32, %c0_i32_0 : i32, i32
  }
  func.func @transform_3(%arg0: i32) -> (i32, i32) {
    %c0_i32 = arith.constant 0 : i32
    %c0_i32_0 = arith.constant 0 : i32
    return %arg0, %c0_i32 : i32, i32
  }
}

</mosaic_0001>

<llo_original>
// kernel: tpu_custom_call.1
$region0: #{tpu_custom_call.1}
  #allocation0 [shape = 'u32[]', space=smem, size = 0x4, offset = 0x4, fixed_abs, tag = 'smem constant byte address 0x4 - core index']
  #allocation1 [shape = 'u32[144,128]{1,0:T(1,128)}', space=vmem, size = 0x12000, scoped, tag = 'internal scratch']
  %s0 = inlined_call_operand.hbm [shape: f32[16,32], index: 0, kind: input, shape index: {}]
  %s1 = inlined_call_operand.vmem [shape: f32[1,32], index: 1, kind: input, shape index: {}]
  %s2 = inlined_call_operand.vmem [shape: f32[1,32], index: 2, kind: input, shape index: {}]
  %s3 = inlined_call_operand.hbm [shape: f32[16,32], index: 3, kind: output, shape index: {}]
  %s4 = sld [smem:[#allocation0]]
  $region49: #{tpu_custom_call.1} parent=0
    _
  %s6 = ssub.s32 1, %s4
  %s7 = scalar_select 0, %s6, %s4
  $region1: #{tpu_custom_call.1} parent=0
    #allocation2 [shape = 'u8[8192]{0}', space=vmem, size = 0x2000, scoped, tag = 'input window, operand 0']
    #allocation3 [shape = 's32[2]{0}', space=sflag, size = 0x8, scoped, tag = 'scoped memory for tpu_custom_call.1']
    #allocation4 [shape = 's32[2]{0}', space=sflag, size = 0x8, scoped, tag = 'scoped memory for tpu_custom_call.1']
    #allocation5 [shape = 'u8[8192]{0}', space=vmem, size = 0x2000, scoped, tag = 'output window, operand 0']
    %8 = vsyncpa [#allocation3], 0
    %s9 = scalar_lea.sflag [#allocation3], 1
    %10 = vsyncpa %s9, 0
    %11 = vsyncpa [#allocation4], 0
    %s12 = scalar_lea.sflag [#allocation4], 1
    %13 = vsyncpa %s12, 0
    loop: start=0, step=1, limit=4
    $region2: #{tpu_custom_call.1} parent=1 // loop_pre_header
      _
    $region3: #{tpu_custom_call.1} parent=1 // loop_header
      %s15 = sphi 0, %s19
      %p16 = scmp.ge.s32.totalorder %s15, 4
      %s25 = sphi 0, %s27
      %s28 = sphi 0, %s25
      %s29 = sphi 0, %s28
      %s45 = sphi 0, %s29
      %s49 = sphi 0, %s49
      %s51 = sphi 0, %s49
      %s52 = sphi 0, %s51
      %s66 = sphi 0, %s52
      %s70 = sphi 0, %s70
      %s72 = sphi 0, %s70
      %s73 = sphi 0, %s72
      %s87 = sphi 0, %s73
      %s93 = sphi 0, %s95
      %s96 = sphi 0, %s93
      %s97 = sphi 0, %s96
      %s113 = sphi 0, %s97
    $region4: #{tpu_custom_call.1} parent=1 // loop_header_branch
      %18 = sbr.rel (%p16) target = $region8
    $region5: #{tpu_custom_call.1} parent=1 // loop_body
      %s20 = ssub.s32 %s15, 1
      %s21 = ssub.s32 %s15, 2
      %s22 = sadd.s32 %s15, 1
      %s23 = ssub.s32 %s15, %s22
      %p24 = scmp.eq.s32.totalorder %s23, 0
      %s26 = sadd.s32 %s25, 1
      %s27 = scalar_select %p24, %s25, %s26
      %p30 = pneg %p24
      %p31 = scmp.eq.s32.totalorder %s15, 1
      %p32 = por %p30, %p31
      %p33 = scmp.ne.s32.totalorder %s25, %s28
      %p34 = scmp.eq.s32.totalorder %s15, 0
      %p35 = por %p33, %p34
      %p36 = scmp.ne.s32.totalorder %s25, %s28
      %p37 = scmp.eq.s32.totalorder %s20, 1
      %p38 = por %p36, %p37
      %p39 = scmp.ne.s32.totalorder %s28, %s29
      %p40 = scmp.eq.s32.totalorder %s20, 0
      %p41 = por %p39, %p40
      %p42 = scmp.ne.s32.totalorder %s28, %s29
      %p43 = scmp.eq.s32.totalorder %s21, 1
      %p44 = por %p42, %p43
      %p46 = scmp.ne.s32.totalorder %s29, %s45
      %p47 = scmp.eq.s32.totalorder %s21, 0
      %p48 = por %p46, %p47
      %s50 = sadd.s32 %s49, 1
      %p53 = scmp.eq.s32.totalorder %s15, 1
      %p54 = scmp.ne.s32.totalorder %s49, %s51
      %p55 = scmp.eq.s32.totalorder %s15, 0
      %p56 = por %p54, %p55
      %p57 = scmp.ne.s32.totalorder %s49, %s51
      %p58 = scmp.eq.s32.totalorder %s20, 1
      %p59 = por %p57, %p58
      %p60 = scmp.ne.s32.totalorder %s51, %s52
      %p61 = scmp.eq.s32.totalorder %s20, 0
      %p62 = por %p60, %p61
      %p63 = scmp.ne.s32.totalorder %s51, %s52
      %p64 = scmp.eq.s32.totalorder %s21, 1
      %p65 = por %p63, %p64
      %p67 = scmp.ne.s32.totalorder %s52, %s66
      %p68 = scmp.eq.s32.totalorder %s21, 0
      %p69 = por %p67, %p68
      %s71 = sadd.s32 %s70, 1
      %p74 = scmp.eq.s32.totalorder %s15, 1
      %p75 = scmp.ne.s32.totalorder %s70, %s72
      %p76 = scmp.eq.s32.totalorder %s15, 0
      %p77 = por %p75, %p76
      %p78 = scmp.ne.s32.totalorder %s70, %s72
      %p79 = scmp.eq.s32.totalorder %s20, 1
      %p80 = por %p78, %p79
      %p81 = scmp.ne.s32.totalorder %s72, %s73
      %p82 = scmp.eq.s32.totalorder %s20, 0
      %p83 = por %p81, %p82
      %p84 = scmp.ne.s32.totalorder %s72, %s73
      %p85 = scmp.eq.s32.totalorder %s21, 1
      %p86 = por %p84, %p85
      %p88 = scmp.ne.s32.totalorder %s73, %s87
      %p89 = scmp.eq.s32.totalorder %s21, 0
      %p90 = por %p88, %p89
      %s91 = ssub.s32 %s15, %s22
      %p92 = scmp.eq.s32.totalorder %s91, 0
      %s94 = sadd.s32 %s93, 1
      %s95 = scalar_select %p92, %s93, %s94
      %p98 = pneg %p92
      %p99 = scmp.eq.s32.totalorder %s15, 1
      %p100 = por %p98, %p99
      %p101 = scmp.ne.s32.totalorder %s93, %s96
      %p102 = scmp.eq.s32.totalorder %s15, 0
      %p103 = por %p101, %p102
      %p104 = scmp.ne.s32.totalorder %s93, %s96
      %p105 = scmp.eq.s32.totalorder %s20, 1
      %p106 = por %p104, %p105
      %p107 = scmp.ne.s32.totalorder %s96, %s97
      %p108 = scmp.eq.s32.totalorder %s20, 0
      %p109 = por %p107, %p108
      %p110 = scmp.ne.s32.totalorder %s96, %s97
      %p111 = scmp.eq.s32.totalorder %s21, 1
      %p112 = por %p110, %p111
      %p114 = scmp.ne.s32.totalorder %s97, %s113
      %p115 = scmp.eq.s32.totalorder %s21, 0
      %p116 = por %p114, %p115
      %p117 = scmp.le.s32.totalorder 1, %s15
      %p118 = scmp.lt.s32.totalorder %s15, 3
      %p119 = pnand %p117, %p118
      %p120 = pneg %p119
      // Predicated region
      $region9: #{tpu_custom_call.1} parent=5 // pred_check
        _
      $region10: #{tpu_custom_call.1} parent=5 // pred_check_branch
        %122 = sbr.rel (%p119) target = $region12
      $region11: #{tpu_custom_call.1} parent=5 // pred_region
        %s123 = ssub.s32 %s15, 1
        // Predicated region
        $region13: #{tpu_custom_call.1} parent=11 // pred_check
          %p124 = pneg %p62
        $region14: #{tpu_custom_call.1} parent=11 // pred_check_branch
          %126 = sbr.rel (%p124) target = $region16
        $region15: #{tpu_custom_call.1} parent=11 // pred_region
          _
        $region16: #{tpu_custom_call.1} parent=11 // pred_fallthru
          _
        // Predicated region
        $region17: #{tpu_custom_call.1} parent=11 // pred_check
          %p127 = pneg %p83
        $region18: #{tpu_custom_call.1} parent=11 // pred_check_branch
          %129 = sbr.rel (%p127) target = $region20
        $region19: #{tpu_custom_call.1} parent=11 // pred_region
          _
        $region20: #{tpu_custom_call.1} parent=11 // pred_fallthru
          _
      $region12: #{tpu_custom_call.1} parent=5 // pred_fallthru
        _
      %p130 = scmp.lt.s32.totalorder %s15, 2
      // Predicated region
      $region21: #{tpu_custom_call.1} parent=5 // pred_check
        %p131 = pneg %p130
      $region22: #{tpu_custom_call.1} parent=5 // pred_check_branch
        %133 = sbr.rel (%p131) target = $region24
      $region23: #{tpu_custom_call.1} parent=5 // pred_region
        // Predicated region
        $region25: #{tpu_custom_call.1} parent=23 // pred_check
          %p134 = pneg %p35
        $region26: #{tpu_custom_call.1} parent=23 // pred_check_branch
          %136 = sbr.rel (%p134) target = $region28
        $region27: #{tpu_custom_call.1} parent=23 // pred_region
          %s137 = sand.u32 %s25, 1
          %s138 = scalar_lea.sflag [#allocation3], %s137
          %s139 = sand.u32 %s25, 1
          %s140 = smul.addr %s139, 8
          %s141 = scalar_lea.vmem [#allocation2], %s140
          %s143 = ssub.s32 128, 128
          %144 = vsyncadd %s138, %s143
          %s145 = smul.addr %s15, 128
          %s146 = scalar_lea.hbm %s0, %s145
          %s148 = sshll.u32 %s141, 4
          %s149 = int_to_ptr.vmem [resolvable:$true] %s148
          %151 = dma.hbm_to_vmem [thread:$0]  %s146, 128, %s149, %s138
        $region28: #{tpu_custom_call.1} parent=23 // pred_fallthru
          _
      $region24: #{tpu_custom_call.1} parent=5 // pred_fallthru
        _
      %p152 = scmp.le.s32.totalorder 1, %s15
      %p153 = scmp.lt.s32.totalorder %s15, 3
      %p154 = pnand %p152, %p153
      %p155 = pneg %p154
      // Predicated region
      $region29: #{tpu_custom_call.1} parent=5 // pred_check
        _
      $region30: #{tpu_custom_call.1} parent=5 // pred_check_branch
        %157 = sbr.rel (%p154) target = $region32
      $region31: #{tpu_custom_call.1} parent=5 // pred_region
        %s158 = ssub.s32 %s15, 1
        %s159 = sand.u32 %s28, 1
        %s160 = scalar_lea.sflag [#allocation3], %s159
        %s161 = sand.u32 %s28, 1
        %s162 = smul.addr %s161, 8
        %s163 = scalar_lea.vmem [#allocation2], %s162
        // Predicated region
        $region33: #{tpu_custom_call.1} parent=31 // pred_check
          %p164 = pneg %p41
        $region34: #{tpu_custom_call.1} parent=31 // pred_check_branch
          %166 = sbr.rel (%p164) target = $region36
        $region35: #{tpu_custom_call.1} parent=31 // pred_region
          %167 = dma.done %s160, 128
        $region36: #{tpu_custom_call.1} parent=31 // pred_fallthru
          _
        %s168 = sand.u32 %s28, 1
        %s169 = scalar_lea.sflag [#allocation3], %s168
        %s170 = sand.u32 %s28, 1
        %s171 = smul.addr %s170, 8
        %s172 = scalar_lea.vmem [#allocation2], %s171
        %p173 = pneg %p41
        %p174 = pneg %p38
        %p175 = pneg %p62
        %p176 = pneg %p59
        %p177 = pneg %p83
        %p178 = pneg %p80
        %p179 = pneg %p109
        %p180 = pneg %p106
        %s181 = sand.u32 %s96, 1
        %s182 = scalar_lea.sflag [#allocation4], %s181
        %s183 = sand.u32 %s96, 1
        %s184 = smul.addr %s183, 8
        %s185 = scalar_lea.vmem [#allocation5], %s184
        %v186 = vld [vmem:[%s163] sm:$0xff]
        %v187 = vld [vmem:[%s1] sm:$0x1]
        %v188 = vld [vmem:[%s2] sm:$0x1]
        %v189 = vmul.f32 %v186, %v186
        %vm190 = vcmask 261120
        %v191 = vsel %vm190, %v189, 0.0
        %192 = vadd.xlane.f32.xlu0 %v191
        %v193 = vpop.xlane.xlu0 %192
        %v194 = vmul.f32 %v193, 0.03125
        %v195 = vadd.f32 %v194, 1e-12
        %v196 = vrsqrt.pop %v195
        %v197 = vmul.f32 %v186, %v196
        %v199 = vlaneseq
        %v200 = vshrl.u32 %v199, 7
        %v201 = vsub.s32 0, %v200
        %v202 = vrot.slane %v187, %v201
        %v204 = vmul.f32 %v197, %v202
        %v206 = vlaneseq
        %v207 = vshrl.u32 %v206, 7
        %v208 = vsub.s32 0, %v207
        %v209 = vrot.slane %v188, %v208
        %v211 = vadd.f32 %v204, %v209
        %212 = vst.msk [vmem:[%s185] sm:$0xff] %vm190, %v211
        %s213 = sand.u32 %s96, 1
        %s214 = scalar_lea.sflag [#allocation4], %s213
        %s215 = sand.u32 %s96, 1
        %s216 = smul.addr %s215, 8
        %s217 = scalar_lea.vmem [#allocation5], %s216
        // Predicated region
        $region37: #{tpu_custom_call.1} parent=31 // pred_check
          %p218 = pneg %p106
        $region38: #{tpu_custom_call.1} parent=31 // pred_check_branch
          %220 = sbr.rel (%p218) target = $region40
        $region39: #{tpu_custom_call.1} parent=31 // pred_region
          %s222 = ssub.s32 128, 128
          %223 = vsyncadd %s214, %s222
          %s224 = smul.addr %s20, 128
          %s225 = scalar_lea.hbm %s3, %s224
          %s227 = sshll.u32 %s217, 4
          %s228 = int_to_ptr.vmem [resolvable:$true] %s227
          %230 = dma.vmem_to_hbm [thread:$0]  %s228, 128, %s225, %s214
        $region40: #{tpu_custom_call.1} parent=31 // pred_fallthru
          _
      $region32: #{tpu_custom_call.1} parent=5 // pred_fallthru
        _
      %p231 = scmp.le.s32.totalorder 2, %s15
      // Predicated region
      $region41: #{tpu_custom_call.1} parent=5 // pred_check
        %p232 = pneg %p231
      $region42: #{tpu_custom_call.1} parent=5 // pred_check_branch
        %234 = sbr.rel (%p232) target = $region44
      $region43: #{tpu_custom_call.1} parent=5 // pred_region
        %s235 = ssub.s32 %s15, 2
        // Predicated region
        $region45: #{tpu_custom_call.1} parent=43 // pred_check
          %p236 = pneg %p112
        $region46: #{tpu_custom_call.1} parent=43 // pred_check_branch
          %238 = sbr.rel (%p236) target = $region48
        $region47: #{tpu_custom_call.1} parent=43 // pred_region
          %s239 = sand.u32 %s97, 1
          %s240 = scalar_lea.sflag [#allocation4], %s239
          %s241 = sand.u32 %s97, 1
          %s242 = smul.addr %s241, 8
          %s243 = scalar_lea.vmem [#allocation5], %s242
          %244 = dma.done %s240, 128
        $region48: #{tpu_custom_call.1} parent=43 // pred_fallthru
          _
      $region44: #{tpu_custom_call.1} parent=5 // pred_fallthru
        _
    $region6: #{tpu_custom_call.1} parent=1 // loop_footer
      %s19 = sadd.s32 1, %s15
    $region7: #{tpu_custom_call.1} parent=1 // loop_footer_branch
      %14 = sbr.rel target = $region3
    $region8: #{tpu_custom_call.1} parent=1 // loop_exit
      _
    %245 = vsyncpa [#allocation3], 1
    %s246 = scalar_lea.sflag [#allocation3], 1
    %247 = vsyncpa %s246, 1
    %248 = vsyncpa [#allocation4], 1
    %s249 = scalar_lea.sflag [#allocation4], 1
    %250 = vsyncpa %s249, 1

</llo_original>
